<compile_context>
chip_gen: v7x
topology: tpu7x:2x2x1
jax: 0.10.0
libtpu: 0.0.40
codegen_flags: <defaults>
</compile_context>

<pallas_src>
import functools
import math

import jax
import jax.numpy as jnp
from jax.experimental import pallas as pl
from jax.experimental.pallas import tpu as pltpu


# ----------------------------------------------------------------------------- helpers
def _round_up(x, m):
    return (x + m - 1) // m * m


def _pad2d(a, rows, cols):
    r, c = a.shape
    if r == rows and c == cols:
        return a
    return jnp.pad(a, ((0, rows - r), (0, cols - c)))


def _choose_dim_tiling(dim):
    """Return (padded_dim, tile): lane-dense tiling that avoids the 128-tile cliff.

    * dim <= 1024 -> single full-width tile (multiple of 128).
    * else        -> largest multiple-of-128 divisor <= 768;
                     last resort: pad up to a multiple of 512 and use 512.
    """
    dim_p = _round_up(dim, 128)
    if dim_p <= 1024:
        return dim_p, dim_p
    for t in range(768, 255, -128):
        if dim_p % t == 0:
            return dim_p, t
    dim_p = _round_up(dim, 512)
    return dim_p, 512


# ----------------------------------------------------------------------------- kernel
def _hlora_kernel(x_ref, w_ref, bias_ref, *rest, use_lora):
    """Base linear + fused LoRA adapter add for one (i, j) output tile.

    Grid = (M/tm, N/tn, K/tk), K innermost.  acc_ref accumulates x@W in f32.
    The adapter rank projection is precomputed outside the kernel; here only the
    rank->Dout matmul runs, once per output tile at the last K step.
    """
    if use_lora:
        lin_ref, lw_ref, o_ref, acc_ref = rest
    else:
        o_ref, acc_ref = rest

    k = pl.program_id(2)

    @pl.when(k == 0)
    def _init():
        acc_ref[...] = jnp.zeros_like(acc_ref)

    acc_ref[...] += jnp.dot(x_ref[...], w_ref[...],
                            preferred_element_type=jnp.float32)

    @pl.when(k == pl.num_programs(2) - 1)
    def _finalize():
        out = acc_ref[...] + bias_ref[...].astype(jnp.float32)   # (tm,tn) + (1,tn)
        if use_lora:
            # scaling already folded into lw host-side.
            out = out + jnp.dot(lin_ref[...], lw_ref[...],
                                preferred_element_type=jnp.float32)
        o_ref[...] = out.astype(o_ref.dtype)


# ----------------------------------------------------------------------------- prepare
def prepare_hlora_params(params, *, scaling_1, scaling_2, do_inference=(True, False)):
    """One-time weight preparation: padding + scaling folding.

    Call once at load time; hlora_forward then only pads the activation."""
    w = params["w_base"]
    Din, Dout = w.shape
    Din_p, tk = _choose_dim_tiling(Din)
    Dout_p, tn = _choose_dim_tiling(Dout)
    use1, use2 = bool(do_inference[0]), bool(do_inference[1])
    dtype = w.dtype
    R = 128                                   # per-branch rank padding (lane-dense)

    prepared = {
        "w": _pad2d(w, Din_p, Dout_p),
        "bias": _pad2d(params["b_base"].reshape(1, -1), 1, Dout_p),
    }

    lora_w_parts = []
    if use1:
        prepared["A"] = _pad2d(params["lora_A"].astype(dtype), Din_p, R)
        lora_w_parts.append(
            _pad2d((scaling_1 * params["lora_B"]).astype(dtype), R, Dout_p))
    if use2:
        prepared["C"] = _pad2d(params["lora_C"].astype(dtype), Din_p, R)
        prepared["D"] = _pad2d(params["lora_D"].astype(dtype), R, R)
        prepared["E"] = _pad2d(params["lora_E"].astype(dtype), R, R)
        lora_w_parts.append(
            _pad2d((scaling_1 * scaling_2 * params["lora_F"]).astype(dtype),
                   R, Dout_p))
    if lora_w_parts:
        # Concatenated so both branches are one 256-deep adapter matmul in-kernel.
        prepared["lora_w"] = jnp.concatenate(lora_w_parts, axis=0)

    meta = dict(Din=Din, Dout=Dout, Din_p=Din_p, Dout_p=Dout_p,
                tk=tk, tn=tn, use1=use1, use2=use2)
    return prepared, meta


# ----------------------------------------------------------------------------- forward
def hlora_forward(x, prepared, meta):
    """x: (batch, seq, in_features) -> (batch, seq, out_features)."""
    B, S, Din = x.shape
    assert Din == meta["Din"]
    M = B * S
    Din_p, Dout_p = meta["Din_p"], meta["Dout_p"]
    tk, tn = meta["tk"], meta["tn"]
    use1, use2 = meta["use1"], meta["use2"]
    use_lora = use1 or use2
    wdtype = prepared["w"].dtype

    itemsize = jnp.dtype(x.dtype).itemsize
    sub = 16 if itemsize == 2 else 8          # sublane packing per dtype

    # M tiling: cap at 512 rows; for M > 512 split near-evenly so row padding is small.
    if M <= 512:
        tm = _round_up(M, sub)
    else:
        n_i = -(-M // 512)
        tm = _round_up(-(-M // n_i), sub)
    M_p = _round_up(M, tm)

    x_p = _pad2d(x.reshape(M, Din).astype(wdtype), M_p, Din_p)

    # Precompute rank projections once (tiny XLA matmuls).  They are invariant in
    # the (N, K) grid axes, so this removes the per-tile recompute + A/C re-DMA
    # and keeps the N axis megacore-parallel.
    inputs = [x_p, prepared["w"], prepared["bias"]]
    in_specs = [
        pl.BlockSpec((tm, tk), lambda i, j, k: (i, k)),   # x tile
        pl.BlockSpec((tk, tn), lambda i, j, k: (k, j)),   # base weight tile
        pl.BlockSpec((1, tn), lambda i, j, k: (0, j)),    # bias tile
    ]
    Rp = 0
    if use_lora:
        lora_in_parts = []
        if use1:
            lora_in_parts.append(jnp.dot(x_p, prepared["A"]))
        if use2:
            t = jnp.dot(x_p, prepared["C"])
            t = jnp.dot(t, prepared["D"])
            t = jnp.dot(t, prepared["E"])
            lora_in_parts.append(t)
        lora_in = (lora_in_parts[0] if len(lora_in_parts) == 1
                   else jnp.concatenate(lora_in_parts, axis=1))
        Rp = lora_in.shape[1]
        inputs += [lora_in, prepared["lora_w"]]
        in_specs += [
            pl.BlockSpec((tm, Rp), lambda i, j, k: (i, 0)),   # rank projection
            pl.BlockSpec((Rp, tn), lambda i, j, k: (0, j)),   # fused B / F (scaled)
        ]

    grid = (M_p // tm, Dout_p // tn, Din_p // tk)
    ni, nj, nk = grid

    flops = 2.0 * M_p * Din_p * Dout_p
    bytes_accessed = itemsize * (
        nj * M_p * Din_p           # x streamed once per N tile
        + ni * Din_p * Dout_p      # W streamed once per M tile
        + ni * Dout_p              # bias
        + M_p * Dout_p)            # output
    if use_lora:
        flops += 2.0 * M_p * Rp * Dout_p
        bytes_accessed += itemsize * (M_p * Rp + ni * Rp * Dout_p)

    kernel = functools.partial(_hlora_kernel, use_lora=use_lora)

    out = pl.pallas_call(
        kernel,
        out_shape=jax.ShapeDtypeStruct((M_p, Dout_p), x.dtype),
        grid_spec=pltpu.PrefetchScalarGridSpec(
            num_scalar_prefetch=0,
            grid=grid,
            in_specs=in_specs,
            out_specs=pl.BlockSpec((tm, tn), lambda i, j, k: (i, j)),
            scratch_shapes=[pltpu.VMEM((tm, tn), jnp.float32)],   # f32 accumulator
        ),
        compiler_params=pltpu.CompilerParams(
            dimension_semantics=("parallel", "parallel", "arbitrary"),
            vmem_limit_bytes=48 * 1024 * 1024),
        cost_estimate=pl.CostEstimate(
            flops=int(flops), transcendentals=0,
            bytes_accessed=int(bytes_accessed)),
    )(*inputs)

    return out[:M, :meta["Dout"]].reshape(B, S, meta["Dout"])


# ----------------------------------------------------------------------------- params
def _kaiming_uniform(key, fan_in, shape, dtype=jnp.float32, a=math.sqrt(5)):
    # nn.init.kaiming_uniform_(w, a=sqrt(5)): bound = sqrt(6 / ((1+a^2) * fan_in))
    gain = math.sqrt(2.0 / (1.0 + a * a))
    bound = gain * math.sqrt(3.0 / fan_in)
    return jax.random.uniform(key, shape, dtype=dtype, minval=-bound, maxval=bound)


def init_hlora_params(key, in_features, out_features, rank_1, rank_2, dtype=jnp.float32):
    ks = jax.random.split(key, 8)
    # All weights stored as (in_dim, out_dim), i.e. transposed from PyTorch (out, in).
    w_base = _kaiming_uniform(ks[0], in_features, (in_features, out_features), dtype)
    b_bound = 1.0 / math.sqrt(in_features)
    b_base = jax.random.uniform(ks[1], (1, out_features), dtype=dtype,
                                minval=-b_bound, maxval=b_bound)
    return {
        "w_base": w_base,
        "b_base": b_base,
        "lora_A": _kaiming_uniform(ks[2], in_features, (in_features, rank_1), dtype),
        "lora_B": _kaiming_uniform(ks[3], rank_1, (rank_1, out_features), dtype),
        "lora_C": _kaiming_uniform(ks[4], in_features, (in_features, rank_2), dtype),
        "lora_D": _kaiming_uniform(ks[5], rank_2, (rank_2, rank_1), dtype),
        "lora_E": _kaiming_uniform(ks[6], rank_1, (rank_1, rank_2), dtype),
        "lora_F": _kaiming_uniform(ks[7], rank_2, (rank_2, out_features), dtype),
    }


# ----------------------------------------------------------------------------- reference
def hlora_reference(x, params, *, scaling_1, scaling_2, do_inference=(True, False)):
    B, S, Din = x.shape
    x2 = x.reshape(B * S, Din)
    res = x2 @ params["w_base"] + params["b_base"]
    if do_inference[0]:
        res = res + scaling_1 * ((x2 @ params["lora_A"]) @ params["lora_B"])
    if do_inference[1]:
        t = x2 @ params["lora_C"] @ params["lora_D"] @ params["lora_E"] @ params["lora_F"]
        res = res + scaling_2 * scaling_1 * t
    return res.reshape(B, S, -1)


# ----------------------------------------------------------------------------- main
if __name__ == "__main__":
    batch, seq = 2, 8
    in_features, out_features = 32, 32
    lora_rank_1, lora_rank_2 = 8, 8
    lora_alpha_1, lora_alpha_2 = 16.0, 16.0
    scaling_1 = lora_alpha_1 / lora_rank_1
    scaling_2 = lora_alpha_2 / lora_rank_2

    key = jax.random.PRNGKey(0)
    k_x, k_p = jax.random.split(key)
    x = jax.random.normal(k_x, (batch, seq, in_features), dtype=jnp.float32)
    params = init_hlora_params(k_p, in_features, out_features,
                               lora_rank_1, lora_rank_2)

    # Module default: only the lora_AB path active.
    prep1, meta1 = prepare_hlora_params(params, scaling_1=scaling_1,
                                        scaling_2=scaling_2,
                                        do_inference=(True, False))
    out = jax.block_until_ready(hlora_forward(x, prep1, meta1))
    ref = hlora_reference(x, params, scaling_1=scaling_1, scaling_2=scaling_2,
                          do_inference=(True, False))
    assert out.shape == (batch, seq, out_features)
    assert jnp.allclose(out, ref, atol=1e-4, rtol=1e-4), "mismatch (branch 1)"

    # Both LoRA branches active.
    prep2, meta2 = prepare_hlora_params(params, scaling_1=scaling_1,
                                        scaling_2=scaling_2,
                                        do_inference=(True, True))
    out2 = jax.block_until_ready(hlora_forward(x, prep2, meta2))
    ref2 = hlora_reference(x, params, scaling_1=scaling_1, scaling_2=scaling_2,
                           do_inference=(True, True))
    assert jnp.allclose(out2, ref2, atol=1e-4, rtol=1e-4), "mismatch (branch 2)"

    # Base layer only (no adapters).
    prep3, meta3 = prepare_hlora_params(params, scaling_1=scaling_1,
                                        scaling_2=scaling_2,
                                        do_inference=(False, False))
    out3 = jax.block_until_ready(hlora_forward(x, prep3, meta3))
    ref3 = hlora_reference(x, params, scaling_1=scaling_1, scaling_2=scaling_2,
                           do_inference=(False, False))
    assert jnp.allclose(out3, ref3, atol=1e-4, rtol=1e-4), "mismatch (base only)"

    print("KERNEL_OK")
</pallas_src>

<mosaic_0001>
module attributes {stable_mosaic.version = 11 : i64} {
  func.func @_hlora_kernel(%arg0: i32, %arg1: i32, %arg2: i32, %arg3: memref<16x128xf32, #tpu.memory_space<vmem>>, %arg4: memref<128x128xf32, #tpu.memory_space<vmem>>, %arg5: memref<1x128xf32, #tpu.memory_space<vmem>>, %arg6: memref<16x128xf32, #tpu.memory_space<vmem>>, %arg7: memref<128x128xf32, #tpu.memory_space<vmem>>, %arg8: memref<16x128xf32, #tpu.memory_space<vmem>>, %arg9: memref<16x128xf32, #tpu.memory_space<vmem>>) attributes {dimension_semantics = [#tpu.dimension_semantics<parallel>, #tpu.dimension_semantics<parallel>, #tpu.dimension_semantics<arbitrary>], iteration_bounds = array<i64: 1, 1, 1>, scalar_prefetch = 0 : i64, scratch_operands = 1 : i64, tpu.core_type = #tpu.core_type<tc>, window_params = [{transform_indices = @transform_0, window_bounds = array<i64: 16, 128>}, {transform_indices = @transform_1, window_bounds = array<i64: 128, 128>}, {transform_indices = @transform_2, window_bounds = array<i64: 1, 128>}, {transform_indices = @transform_3, window_bounds = array<i64: 16, 128>}, {transform_indices = @transform_4, window_bounds = array<i64: 128, 128>}, {transform_indices = @transform_5, window_bounds = array<i64: 16, 128>}]} {
    %c0_i32 = arith.constant 0 : i32
    %0 = arith.cmpi eq, %arg2, %c0_i32 : i32
    %1 = arith.extui %0 : i1 to i32
    %c0_i32_0 = arith.constant 0 : i32
    %2 = arith.cmpi ne, %1, %c0_i32_0 : i32
    scf.if %2 {
      %cst_10 = arith.constant 0.000000e+00 : f32
      %12 = vector.broadcast %cst_10 : f32 to vector<16x128xf32>
      %c0_11 = arith.constant 0 : index
      %c0_12 = arith.constant 0 : index
      %13 = vector.load %arg9[%c0_11, %c0_12] : memref<16x128xf32, #tpu.memory_space<vmem>>, vector<16x128xf32>
      tpu.vector_store %arg9[%c0_11, %c0_12], %12 {strides = array<i32>} : memref<16x128xf32, #tpu.memory_space<vmem>>, vector<16x128xf32>,
    } else {
    }
    %c0 = arith.constant 0 : index
    %c0_1 = arith.constant 0 : index
    %3 = vector.load %arg9[%c0, %c0_1] : memref<16x128xf32, #tpu.memory_space<vmem>>, vector<16x128xf32>
    %c0_2 = arith.constant 0 : index
    %c0_3 = arith.constant 0 : index
    %4 = vector.load %arg3[%c0_2, %c0_3] : memref<16x128xf32, #tpu.memory_space<vmem>>, vector<16x128xf32>
    %c0_4 = arith.constant 0 : index
    %c0_5 = arith.constant 0 : index
    %5 = vector.load %arg4[%c0_4, %c0_5] : memref<128x128xf32, #tpu.memory_space<vmem>>, vector<128x128xf32>
    %cst = arith.constant dense<0.000000e+00> : vector<16x128xf32>
    %6 = tpu.matmul %4, %5, %cst {dimension_numbers = #tpu.dot_dimension_numbers<[1], [0], [0], [1], [0, 0, 1, 1], [], []>} : vector<16x128xf32>, vector<128x128xf32>, vector<16x128xf32> -> vector<16x128xf32>
    %7 = arith.addf %3, %6 : vector<16x128xf32>
    %c0_6 = arith.constant 0 : index
    %c0_7 = arith.constant 0 : index
    %8 = vector.load %arg9[%c0_6, %c0_7] : memref<16x128xf32, #tpu.memory_space<vmem>>, vector<16x128xf32>
    tpu.vector_store %arg9[%c0_6, %c0_7], %7 {strides = array<i32>} : memref<16x128xf32, #tpu.memory_space<vmem>>, vector<16x128xf32>,
    %c0_i32_8 = arith.constant 0 : i32
    %9 = arith.cmpi eq, %arg2, %c0_i32_8 : i32
    %10 = arith.extui %9 : i1 to i32
    %c0_i32_9 = arith.constant 0 : i32
    %11 = arith.cmpi ne, %10, %c0_i32_9 : i32
    scf.if %11 {
      %c0_10 = arith.constant 0 : index
      %c0_11 = arith.constant 0 : index
      %12 = vector.load %arg9[%c0_10, %c0_11] : memref<16x128xf32, #tpu.memory_space<vmem>>, vector<16x128xf32>
      %c0_12 = arith.constant 0 : index
      %c0_13 = arith.constant 0 : index
      %13 = vector.load %arg5[%c0_12, %c0_13] : memref<1x128xf32, #tpu.memory_space<vmem>>, vector<1x128xf32>
      %14 = vector.broadcast %13 : vector<1x128xf32> to vector<16x128xf32>
      %15 = arith.addf %12, %14 : vector<16x128xf32>
      %c0_14 = arith.constant 0 : index
      %c0_15 = arith.constant 0 : index
      %16 = vector.load %arg6[%c0_14, %c0_15] : memref<16x128xf32, #tpu.memory_space<vmem>>, vector<16x128xf32>
      %c0_16 = arith.constant 0 : index
      %c0_17 = arith.constant 0 : index
      %17 = vector.load %arg7[%c0_16, %c0_17] : memref<128x128xf32, #tpu.memory_space<vmem>>, vector<128x128xf32>
      %cst_18 = arith.constant dense<0.000000e+00> : vector<16x128xf32>
      %18 = tpu.matmul %16, %17, %cst_18 {dimension_numbers = #tpu.dot_dimension_numbers<[1], [0], [0], [1], [0, 0, 1, 1], [], []>} : vector<16x128xf32>, vector<128x128xf32>, vector<16x128xf32> -> vector<16x128xf32>
      %19 = arith.addf %15, %18 : vector<16x128xf32>
      %c0_19 = arith.constant 0 : index
      %c0_20 = arith.constant 0 : index
      %20 = vector.load %arg8[%c0_19, %c0_20] : memref<16x128xf32, #tpu.memory_space<vmem>>, vector<16x128xf32>
      tpu.vector_store %arg8[%c0_19, %c0_20], %19 {strides = array<i32>} : memref<16x128xf32, #tpu.memory_space<vmem>>, vector<16x128xf32>,
    } else {
    }
    return
  }
  func.func @transform_0(%arg0: i32, %arg1: i32, %arg2: i32) -> (i32, i32) {
    %c0_i32 = arith.constant 0 : i32
    return %arg0, %arg2 : i32, i32
  }
  func.func @transform_1(%arg0: i32, %arg1: i32, %arg2: i32) -> (i32, i32) {
    %c0_i32 = arith.constant 0 : i32
    return %arg2, %arg1 : i32, i32
  }
  func.func @transform_2(%arg0: i32, %arg1: i32, %arg2: i32) -> (i32, i32) {
    %c0_i32 = arith.constant 0 : i32
    %c0_i32_0 = arith.constant 0 : i32
    return %c0_i32, %arg1 : i32, i32
  }
  func.func @transform_3(%arg0: i32, %arg1: i32, %arg2: i32) -> (i32, i32) {
    %c0_i32 = arith.constant 0 : i32
    %c0_i32_0 = arith.constant 0 : i32
    return %arg0, %c0_i32 : i32, i32
  }
  func.func @transform_4(%arg0: i32, %arg1: i32, %arg2: i32) -> (i32, i32) {
    %c0_i32 = arith.constant 0 : i32
    %c0_i32_0 = arith.constant 0 : i32
    return %c0_i32, %arg1 : i32, i32
  }
  func.func @transform_5(%arg0: i32, %arg1: i32, %arg2: i32) -> (i32, i32) {
    %c0_i32 = arith.constant 0 : i32
    return %arg0, %arg1 : i32, i32
  }
}

</mosaic_0001>

<llo_original>
// kernel: tpu_custom_call.1
$region0: #{tpu_custom_call.1}
  #allocation0 [shape = 'u32[]', space=smem, size = 0x4, offset = 0x4, fixed_abs, tag = 'smem constant byte address 0x4 - core index']
  #allocation1 [shape = 'u32[144,128]{1,0:T(1,128)}', space=vmem, size = 0x12000, scoped, tag = 'internal scratch']
  #allocation2 [shape = 'f32[16,128]{1,0:T(8,128)}', space=vmem, size = 0x2000, scoped, tag = 'scratch operand']
  %s0 = inlined_call_operand.hbm [shape: f32[16,128], index: 0, kind: input, shape index: {}]
  %s1 = inlined_call_operand.hbm [shape: f32[128,128], index: 1, kind: input, shape index: {}]
  %s2 = inlined_call_operand.vmem [shape: f32[1,128], index: 2, kind: input, shape index: {}]
  %s3 = inlined_call_operand.hbm [shape: f32[16,128], index: 3, kind: input, shape index: {}]
  %s4 = inlined_call_operand.hbm [shape: f32[128,128], index: 4, kind: input, shape index: {}]
  %s5 = inlined_call_operand.hbm [shape: f32[16,128], index: 5, kind: output, shape index: {}]
  %s6 = sld [smem:[#allocation0]]
  $region54: #{tpu_custom_call.1} parent=0
    _
  %s8 = ssub.s32 1, %s6
  %s9 = scalar_select 0, %s8, %s6
  $region1: #{tpu_custom_call.1} parent=0
    #allocation3 [shape = 'u8[8192]{0}', space=vmem, size = 0x2000, scoped, tag = 'input window, operand 0, single buffered']
    #allocation4 [shape = 's32[1]{0}', space=sflag, size = 0x4, scoped, tag = 'scoped memory for tpu_custom_call.1']
    #allocation5 [shape = 's32[1]{0}', space=sflag, size = 0x4, scoped, tag = 'scoped memory for tpu_custom_call.1']
    #allocation6 [shape = 'u8[65536]{0}', space=vmem, size = 0x10000, scoped, tag = 'input window, operand 1, single buffered']
    #allocation7 [shape = 's32[1]{0}', space=sflag, size = 0x4, scoped, tag = 'scoped memory for tpu_custom_call.1']
    #allocation8 [shape = 'u8[8192]{0}', space=vmem, size = 0x2000, scoped, tag = 'input window, operand 3, single buffered']
    #allocation9 [shape = 'u8[65536]{0}', space=vmem, size = 0x10000, scoped, tag = 'input window, operand 4, single buffered']
    #allocation10 [shape = 's32[1]{0}', space=sflag, size = 0x4, scoped, tag = 'scoped memory for tpu_custom_call.1']
    #allocation11 [shape = 'u8[8192]{0}', space=vmem, size = 0x2000, scoped, tag = 'output window, operand 0, single buffered']
    %10 = vsyncpa [#allocation4], 0
    %11 = vsyncpa [#allocation7], 0
    %12 = vsyncpa [#allocation10], 0
    %13 = vsyncpa [#allocation5], 0
    // Predicated region
    $region2: #{tpu_custom_call.1} parent=1 // pred_check
      _
    $region3: #{tpu_custom_call.1} parent=1 // pred_check_branch
      %15 = sbr.rel (0) target = $region5
    $region4: #{tpu_custom_call.1} parent=1 // pred_region
      %s17 = ssub.s32 256, 256
      %18 = vsyncadd [#allocation4], %s17
      %s19 = sshll.u32 [#allocation3], 4
      %s20 = int_to_ptr.vmem [resolvable:$true] %s19
      %25 = dma.hbm_to_vmem [thread:$0]  %s0, 256, %s20, [#allocation4], 128, 128, 8
    $region5: #{tpu_custom_call.1} parent=1 // pred_fallthru
      _
    // Predicated region
    $region6: #{tpu_custom_call.1} parent=1 // pred_check
      _
    $region7: #{tpu_custom_call.1} parent=1 // pred_check_branch
      %27 = sbr.rel (0) target = $region9
    $region8: #{tpu_custom_call.1} parent=1 // pred_region
      %s29 = ssub.s32 2048, 2048
      %30 = vsyncadd [#allocation7], %s29
      %s31 = sshll.u32 [#allocation6], 4
      %s32 = int_to_ptr.vmem [resolvable:$true] %s31
      %37 = dma.hbm_to_vmem [thread:$0]  %s1, 2048, %s32, [#allocation7], 128, 128, 8
    $region9: #{tpu_custom_call.1} parent=1 // pred_fallthru
      _
    // Predicated region
    $region10: #{tpu_custom_call.1} parent=1 // pred_check
      _
    $region11: #{tpu_custom_call.1} parent=1 // pred_check_branch
      %39 = sbr.rel (0) target = $region13
    $region12: #{tpu_custom_call.1} parent=1 // pred_region
      _
    $region13: #{tpu_custom_call.1} parent=1 // pred_fallthru
      _
    // Predicated region
    $region14: #{tpu_custom_call.1} parent=1 // pred_check
      _
    $region15: #{tpu_custom_call.1} parent=1 // pred_check_branch
      %41 = sbr.rel (0) target = $region17
    $region16: #{tpu_custom_call.1} parent=1 // pred_region
      %s43 = ssub.s32 256, 256
      %44 = vsyncadd [#allocation7], %s43
      %s45 = sshll.u32 [#allocation8], 4
      %s46 = int_to_ptr.vmem [resolvable:$true] %s45
      %51 = dma.hbm_to_vmem [thread:$0]  %s3, 256, %s46, [#allocation7], 128, 128, 8
    $region17: #{tpu_custom_call.1} parent=1 // pred_fallthru
      _
    // Predicated region
    $region18: #{tpu_custom_call.1} parent=1 // pred_check
      _
    $region19: #{tpu_custom_call.1} parent=1 // pred_check_branch
      %53 = sbr.rel (0) target = $region21
    $region20: #{tpu_custom_call.1} parent=1 // pred_region
      %s55 = ssub.s32 2048, 2048
      %56 = vsyncadd [#allocation10], %s55
      %s57 = sshll.u32 [#allocation9], 4
      %s58 = int_to_ptr.vmem [resolvable:$true] %s57
      %63 = dma.hbm_to_vmem [thread:$0]  %s4, 2048, %s58, [#allocation10], 128, 128, 8
    $region21: #{tpu_custom_call.1} parent=1 // pred_fallthru
      _
    // Predicated region
    $region22: #{tpu_custom_call.1} parent=1 // pred_check
      _
    $region23: #{tpu_custom_call.1} parent=1 // pred_check_branch
      %65 = sbr.rel (0) target = $region25
    $region24: #{tpu_custom_call.1} parent=1 // pred_region
      %66 = dma.done [#allocation4], 256
    $region25: #{tpu_custom_call.1} parent=1 // pred_fallthru
      _
    // Predicated region
    $region26: #{tpu_custom_call.1} parent=1 // pred_check
      _
    $region27: #{tpu_custom_call.1} parent=1 // pred_check_branch
      %68 = sbr.rel (0) target = $region29
    $region28: #{tpu_custom_call.1} parent=1 // pred_region
      %69 = dma.done [#allocation7], 2048
    $region29: #{tpu_custom_call.1} parent=1 // pred_fallthru
      _
    // Predicated region
    $region30: #{tpu_custom_call.1} parent=1 // pred_check
      _
    $region31: #{tpu_custom_call.1} parent=1 // pred_check_branch
      %71 = sbr.rel (0) target = $region33
    $region32: #{tpu_custom_call.1} parent=1 // pred_region
      %72 = dma.done [#allocation7], 256
    $region33: #{tpu_custom_call.1} parent=1 // pred_fallthru
      _
    // Predicated region
    $region34: #{tpu_custom_call.1} parent=1 // pred_check
      _
    $region35: #{tpu_custom_call.1} parent=1 // pred_check_branch
      %74 = sbr.rel (0) target = $region37
    $region36: #{tpu_custom_call.1} parent=1 // pred_region
      %75 = dma.done [#allocation10], 2048
    $region37: #{tpu_custom_call.1} parent=1 // pred_fallthru
      _
    %p76 = scmp.eq.s32.totalorder 0, 0
    // Predicated region
    $region38: #{tpu_custom_call.1} parent=1 // pred_check
      %p77 = pneg %p76
    $region39: #{tpu_custom_call.1} parent=1 // pred_check_branch
      %79 = sbr.rel (%p77) target = $region41
    $region40: #{tpu_custom_call.1} parent=1 // pred_region
      %80 = vst [vmem:[#allocation2] sm:$0xff] 0.0
      %81 = vst [vmem:[#allocation2 + $0x8] sm:$0xff] 0.0
    $region41: #{tpu_custom_call.1} parent=1 // pred_fallthru
      _
    %v82 = vld [vmem:[#allocation2] sm:$0xff]
    %v83 = vld [vmem:[#allocation2 + $0x8] sm:$0xff]
    %v84 = vld [vmem:[#allocation3] sm:$0xff]
    %v85 = vld [vmem:[#allocation3 + $0x8] sm:$0xff]
    %v86 = vld [vmem:[#allocation6] sm:$0xff]
    %v87 = vld [vmem:[#allocation6 + $0x8] sm:$0xff]
    %v88 = vld [vmem:[#allocation6 + $0x10] sm:$0xff]
    %v89 = vld [vmem:[#allocation6 + $0x18] sm:$0xff]
    %v90 = vld [vmem:[#allocation6 + $0x20] sm:$0xff]
    %v91 = vld [vmem:[#allocation6 + $0x28] sm:$0xff]
    %v92 = vld [vmem:[#allocation6 + $0x30] sm:$0xff]
    %v93 = vld [vmem:[#allocation6 + $0x38] sm:$0xff]
    %v94 = vld [vmem:[#allocation6 + $0x40] sm:$0xff]
    %v95 = vld [vmem:[#allocation6 + $0x48] sm:$0xff]
    %v96 = vld [vmem:[#allocation6 + $0x50] sm:$0xff]
    %v97 = vld [vmem:[#allocation6 + $0x58] sm:$0xff]
    %v98 = vld [vmem:[#allocation6 + $0x60] sm:$0xff]
    %v99 = vld [vmem:[#allocation6 + $0x68] sm:$0xff]
    %v100 = vld [vmem:[#allocation6 + $0x70] sm:$0xff]
    %v101 = vld [vmem:[#allocation6 + $0x78] sm:$0xff]
    %102 = vmatprep.subr.mxu0 0.0
    %103 = vmatpush1.msra.mxu0 %v86
    %104 = vmatprep.subr.mxu0 0.0
    %105 = vmatpush1.msra.mxu0 %v87
    %106 = vmatprep.subr.mxu0 0.0
    %107 = vmatpush1.msra.mxu0 %v88
    %108 = vmatprep.subr.mxu0 0.0
    %109 = vmatpush1.msra.mxu0 %v89
    %110 = vmatprep.subr.mxu0 0.0
    %111 = vmatpush1.msra.mxu0 %v90
    %112 = vmatprep.subr.mxu0 0.0
    %113 = vmatpush1.msra.mxu0 %v91
    %114 = vmatprep.subr.mxu0 0.0
    %115 = vmatpush1.msra.mxu0 %v92
    %116 = vmatprep.subr.mxu0 0.0
    %117 = vmatpush1.msra.mxu0 %v93
    %118 = vmatprep.subr.mxu0 0.0
    %119 = vmatpush1.msra.mxu0 %v94
    %120 = vmatprep.subr.mxu0 0.0
    %121 = vmatpush1.msra.mxu0 %v95
    %122 = vmatprep.subr.mxu0 0.0
    %123 = vmatpush1.msra.mxu0 %v96
    %124 = vmatprep.subr.mxu0 0.0
    %125 = vmatpush1.msra.mxu0 %v97
    %126 = vmatprep.subr.mxu0 0.0
    %127 = vmatpush1.msra.mxu0 %v98
    %128 = vmatprep.subr.mxu0 0.0
    %129 = vmatpush1.msra.mxu0 %v99
    %130 = vmatprep.subr.mxu0 0.0
    %131 = vmatpush1.msra.mxu0 %v100
    %132 = vmatprep.subr.mxu0 0.0
    %133 = vmatpush1.msra.mxu0 %v101
    %134 = vmatprep.subr.mxu0 0.0
    %135 = vmatpush1.msra.mxu0 0.0
    %136 = vmatprep.subr.mxu0 0.0
    %137 = vmatpush1.msra.mxu0 0.0
    %138 = vmatprep.subr.mxu0 0.0
    %139 = vmatpush1.msra.mxu0 0.0
    %140 = vmatprep.subr.mxu0 0.0
    %141 = vmatpush1.msra.mxu0 0.0
    %142 = vmatprep.subr.mxu0 0.0
    %143 = vmatpush1.msra.mxu0 0.0
    %144 = vmatprep.subr.mxu0 0.0
    %145 = vmatpush1.msra.mxu0 0.0
    %146 = vmatprep.subr.mxu0 0.0
    %147 = vmatpush1.msra.mxu0 0.0
    %148 = vmatprep.subr.mxu0 0.0
    %149 = vmatpush1.msra.mxu0 0.0
    %150 = vmatprep.subr.mxu0 0.0
    %151 = vmatpush1.msra.mxu0 0.0
    %152 = vmatprep.subr.mxu0 0.0
    %153 = vmatpush1.msra.mxu0 0.0
    %154 = vmatprep.subr.mxu0 0.0
    %155 = vmatpush1.msra.mxu0 0.0
    %156 = vmatprep.subr.mxu0 0.0
    %157 = vmatpush1.msra.mxu0 0.0
    %158 = vmatprep.subr.mxu0 0.0
    %159 = vmatpush1.msra.mxu0 0.0
    %160 = vmatprep.subr.mxu0 0.0
    %161 = vmatpush1.msra.mxu0 0.0
    %162 = vmatprep.subr.mxu0 0.0
    %163 = vmatpush1.msra.mxu0 0.0
    %164 = vmatprep.subr.mxu0 0.0
    %165 = vmatpush1.msra.mxu0 0.0
    %166 = vmatprep.mubr.f32.mxu0 0.0
    %167 = vmatmul.mubr.f32.gmra.mrb[0].mxu0 %v84
    %v168 = vpop.f32.mrb[0].mxu0
    %v169 = vadd.f32 0.0, %v168
    %v170 = vpop.f32.mrb[0].mxu0
    %171 = vmatprep.mubr.f32.mxu0 0.0
    %172 = vmatmul.mubr.f32.gmra.mrb[0].mxu0 %v85
    %v173 = vpop.f32.mrb[0].mxu0
    %v174 = vadd.f32 0.0, %v173
    %v175 = vpop.f32.mrb[0].mxu0
    %176 = vdwg.mxu0
    %v177 = vadd.f32 %v82, %v169
    %v178 = vadd.f32 %v83, %v174
    %179 = vst [vmem:[#allocation2] sm:$0xff] %v177
    %180 = vst [vmem:[#allocation2 + $0x8] sm:$0xff] %v178
    // Predicated region
    $region42: #{tpu_custom_call.1} parent=1 // pred_check
      %p181 = pneg %p76
    $region43: #{tpu_custom_call.1} parent=1 // pred_check_branch
      %183 = sbr.rel (%p181) target = $region45
    $region44: #{tpu_custom_call.1} parent=1 // pred_region
      %v184 = vld [vmem:[#allocation2] sm:$0xff]
      %v185 = vld [vmem:[#allocation2 + $0x8] sm:$0xff]
      %v186 = vld [vmem:[%s2] sm:$0x1]
      %v188 = vlaneseq
      %v189 = vshrl.u32 %v188, 7
      %v190 = vsub.s32 0, %v189
      %v191 = vrot.slane %v186, %v190
      %v193 = vadd.f32 %v184, %v191
      %v194 = vadd.f32 %v185, %v191
      %v195 = vld [vmem:[#allocation8] sm:$0xff]
      %v196 = vld [vmem:[#allocation8 + $0x8] sm:$0xff]
      %v197 = vld [vmem:[#allocation9] sm:$0xff]
      %v198 = vld [vmem:[#allocation9 + $0x8] sm:$0xff]
      %v199 = vld [vmem:[#allocation9 + $0x10] sm:$0xff]
      %v200 = vld [vmem:[#allocation9 + $0x18] sm:$0xff]
      %v201 = vld [vmem:[#allocation9 + $0x20] sm:$0xff]
      %v202 = vld [vmem:[#allocation9 + $0x28] sm:$0xff]
      %v203 = vld [vmem:[#allocation9 + $0x30] sm:$0xff]
      %v204 = vld [vmem:[#allocation9 + $0x38] sm:$0xff]
      %v205 = vld [vmem:[#allocation9 + $0x40] sm:$0xff]
      %v206 = vld [vmem:[#allocation9 + $0x48] sm:$0xff]
      %v207 = vld [vmem:[#allocation9 + $0x50] sm:$0xff]
      %v208 = vld [vmem:[#allocation9 + $0x58] sm:$0xff]
      %v209 = vld [vmem:[#allocation9 + $0x60] sm:$0xff]
      %v210 = vld [vmem:[#allocation9 + $0x68] sm:$0xff]
      %v211 = vld [vmem:[#allocation9 + $0x70] sm:$0xff]
      %v212 = vld [vmem:[#allocation9 + $0x78] sm:$0xff]
      %213 = vmatprep.subr.mxu0 0.0
      %214 = vmatpush1.msra.mxu0 %v197
      %215 = vmatprep.subr.mxu0 0.0
      %216 = vmatpush1.msra.mxu0 %v198
      %217 = vmatprep.subr.mxu0 0.0
      %218 = vmatpush1.msra.mxu0 %v199
      %219 = vmatprep.subr.mxu0 0.0
      %220 = vmatpush1.msra.mxu0 %v200
      %221 = vmatprep.subr.mxu0 0.0
      %222 = vmatpush1.msra.mxu0 %v201
      %223 = vmatprep.subr.mxu0 0.0
      %224 = vmatpush1.msra.mxu0 %v202
      %225 = vmatprep.subr.mxu0 0.0
      %226 = vmatpush1.msra.mxu0 %v203
      %227 = vmatprep.subr.mxu0 0.0
      %228 = vmatpush1.msra.mxu0 %v204
      %229 = vmatprep.subr.mxu0 0.0
      %230 = vmatpush1.msra.mxu0 %v205
      %231 = vmatprep.subr.mxu0 0.0
      %232 = vmatpush1.msra.mxu0 %v206
      %233 = vmatprep.subr.mxu0 0.0
      %234 = vmatpush1.msra.mxu0 %v207
      %235 = vmatprep.subr.mxu0 0.0
      %236 = vmatpush1.msra.mxu0 %v208
      %237 = vmatprep.subr.mxu0 0.0
      %238 = vmatpush1.msra.mxu0 %v209
      %239 = vmatprep.subr.mxu0 0.0
      %240 = vmatpush1.msra.mxu0 %v210
      %241 = vmatprep.subr.mxu0 0.0
      %242 = vmatpush1.msra.mxu0 %v211
      %243 = vmatprep.subr.mxu0 0.0
      %244 = vmatpush1.msra.mxu0 %v212
      %245 = vmatprep.subr.mxu0 0.0
      %246 = vmatpush1.msra.mxu0 0.0
      %247 = vmatprep.subr.mxu0 0.0
      %248 = vmatpush1.msra.mxu0 0.0
      %249 = vmatprep.subr.mxu0 0.0
      %250 = vmatpush1.msra.mxu0 0.0
      %251 = vmatprep.subr.mxu0 0.0
      %252 = vmatpush1.msra.mxu0 0.0
      %253 = vmatprep.subr.mxu0 0.0
      %254 = vmatpush1.msra.mxu0 0.0
      %255 = vmatprep.subr.mxu0 0.0
      %256 = vmatpush1.msra.mxu0 0.0
      %257 = vmatprep.subr.mxu0 0.0
      %258 = vmatpush1.msra.mxu0 0.0
      %259 = vmatprep.subr.mxu0 0.0
      %260 = vmatpush1.msra.mxu0 0.0
      %261 = vmatprep.subr.mxu0 0.0
      %262 = vmatpush1.msra.mxu0 0.0
      %263 = vmatprep.subr.mxu0 0.0
      %264 = vmatpush1.msra.mxu0 0.0
      %265 = vmatprep.subr.mxu0 0.0
      %266 = vmatpush1.msra.mxu0 0.0
      %267 = vmatprep.subr.mxu0 0.0
      %268 = vmatpush1.msra.mxu0 0.0
      %269 = vmatprep.subr.mxu0 0.0
      %270 = vmatpush1.msra.mxu0 0.0
      %271 = vmatprep.subr.mxu0 0.0
      %272 = vmatpush1.msra.mxu0 0.0
      %273 = vmatprep.subr.mxu0 0.0
      %274 = vmatpush1.msra.mxu0 0.0
      %275 = vmatprep.subr.mxu0 0.0
      %276 = vmatpush1.msra.mxu0 0.0
      %277 = vmatprep.mubr.f32.mxu0 0.0
      %278 = vmatmul.mubr.f32.gmra.mrb[0].mxu0 %v195
      %v279 = vpop.f32.mrb[0].mxu0
      %v280 = vadd.f32 0.0, %v279
      %v281 = vpop.f32.mrb[0].mxu0
      %282 = vmatprep.mubr.f32.mxu0 0.0
      %283 = vmatmul.mubr.f32.gmra.mrb[0].mxu0 %v196
      %v284 = vpop.f32.mrb[0].mxu0
      %v285 = vadd.f32 0.0, %v284
      %v286 = vpop.f32.mrb[0].mxu0
      %287 = vdwg.mxu0
      %v288 = vadd.f32 %v193, %v280
      %v289 = vadd.f32 %v194, %v285
      %290 = vst [vmem:[#allocation11] sm:$0xff] %v288
      %291 = vst [vmem:[#allocation11 + $0x8] sm:$0xff] %v289
    $region45: #{tpu_custom_call.1} parent=1 // pred_fallthru
      _
    // Predicated region
    $region46: #{tpu_custom_call.1} parent=1 // pred_check
      _
    $region47: #{tpu_custom_call.1} parent=1 // pred_check_branch
      %293 = sbr.rel (0) target = $region49
    $region48: #{tpu_custom_call.1} parent=1 // pred_region
      %s295 = ssub.s32 256, 256
      %296 = vsyncadd [#allocation5], %s295
      %s297 = sshll.u32 [#allocation11], 4
      %s298 = int_to_ptr.vmem [resolvable:$true] %s297
      %303 = dma.vmem_to_hbm [thread:$0]  %s298, 256, %s5, [#allocation5], 128, 128, 8
    $region49: #{tpu_custom_call.1} parent=1 // pred_fallthru
      _
    // Predicated region
    $region50: #{tpu_custom_call.1} parent=1 // pred_check
      _
    $region51: #{tpu_custom_call.1} parent=1 // pred_check_branch
      %305 = sbr.rel (0) target = $region53
    $region52: #{tpu_custom_call.1} parent=1 // pred_region
      %306 = dma.done [#allocation5], 256
    $region53: #{tpu_custom_call.1} parent=1 // pred_fallthru
      _
    %307 = vsyncpa [#allocation4], 1
    %308 = vsyncpa [#allocation7], 1
    %309 = vsyncpa [#allocation10], 1
    %310 = vsyncpa [#allocation5], 1

</llo_original>
